<compile_context>
chip_gen: v7x
topology: tpu7x:2x2x1
jax: 0.10.0
libtpu: 0.0.40
codegen_flags: <defaults>
</compile_context>

<pallas_src>
import jax
import jax.numpy as jnp
from jax.experimental import pallas as pl
from jax.experimental.pallas import tpu as pltpu


def linear_sub_kernel(x_ref, w_ref, b_ref, o_ref):
    # x_ref: (M, K), w_ref: (K, N) (pre-transposed), b_ref: (1, N) raw bias.
    # MXU matmul with f32 accumulation; bias add and the "-10" ride in an
    # otherwise idle VPU slot, in full f32 precision.
    acc = jnp.dot(x_ref[...], w_ref[...], preferred_element_type=jnp.float32)
    o_ref[...] = (acc + b_ref[...] - 10.0).astype(o_ref.dtype)


@jax.jit
def linear_sub10(x, w_kn, b2):
    """x: (M, K) f32, w_kn: (K, N) f32 (already transposed), b2: (1, N) f32.

    Returns x @ w_kn + b2 - 10, matching the PyTorch module's forward.
    """
    M, K = x.shape
    N = w_kn.shape[1]
    cost = pl.CostEstimate(
        flops=2 * M * K * N,
        transcendentals=0,
        bytes_accessed=4 * (M * K + K * N + N + M * N),
    )
    return pl.pallas_call(
        linear_sub_kernel,
        out_shape=jax.ShapeDtypeStruct((M, N), x.dtype),
        in_specs=[
            pl.BlockSpec(memory_space=pltpu.MemorySpace.VMEM),  # x    (M, K)
            pl.BlockSpec(memory_space=pltpu.MemorySpace.VMEM),  # w_kn (K, N)
            pl.BlockSpec(memory_space=pltpu.MemorySpace.VMEM),  # b2   (1, N)
        ],
        out_specs=pl.BlockSpec(memory_space=pltpu.MemorySpace.VMEM),
        cost_estimate=cost,
    )(x, w_kn, b2)


if __name__ == "__main__":
    key = jax.random.PRNGKey(0)
    kx, kw, kb = jax.random.split(key, 3)

    M, K, N = 20, 100, 10
    x1 = jax.random.normal(kx, (M, K), dtype=jnp.float32)
    # Deterministic parameter init (torch.nn.Linear-like uniform bound 1/sqrt(K)).
    bound = 1.0 / (K ** 0.5)
    weight = jax.random.uniform(kw, (N, K), minval=-bound, maxval=bound,
                                dtype=jnp.float32)  # torch layout (N, K)
    bias = jax.random.uniform(kb, (N,), minval=-bound, maxval=bound,
                              dtype=jnp.float32)

    # One-time parameter setup (outside the per-call path):
    #   transpose weight to (K, N) and reshape bias to (1, N).
    w_kn = jnp.asarray(weight.T)      # (K, N)
    b2 = bias.reshape(1, N)           # (1, N), raw bias — "-10" is in-kernel

    out = linear_sub10(x1, w_kn, b2)
    out = jax.block_until_ready(out)

    # Reference check against plain JAX (original torch semantics).
    ref = x1 @ weight.T + bias - 10.0
    assert out.shape == (M, N)
    assert jnp.allclose(out, ref, atol=1e-5, rtol=1e-5)
    print("KERNEL_OK")
</pallas_src>

<mosaic_0001>
module attributes {stable_mosaic.version = 11 : i64} {
  func.func @linear_sub_kernel(%arg0: memref<20x100xf32, #tpu.memory_space<vmem>>, %arg1: memref<100x10xf32, #tpu.memory_space<vmem>>, %arg2: memref<1x10xf32, #tpu.memory_space<vmem>>, %arg3: memref<20x10xf32, #tpu.memory_space<vmem>>) attributes {dimension_semantics = [], scalar_prefetch = 0 : i64, scratch_operands = 0 : i64, tpu.core_type = #tpu.core_type<tc>} {
    %c0 = arith.constant 0 : index
    %c0_0 = arith.constant 0 : index
    %0 = vector.load %arg0[%c0, %c0_0] : memref<20x100xf32, #tpu.memory_space<vmem>>, vector<20x100xf32>
    %c0_1 = arith.constant 0 : index
    %c0_2 = arith.constant 0 : index
    %1 = vector.load %arg1[%c0_1, %c0_2] : memref<100x10xf32, #tpu.memory_space<vmem>>, vector<100x10xf32>
    %cst = arith.constant dense<0.000000e+00> : vector<20x10xf32>
    %2 = tpu.matmul %0, %1, %cst {dimension_numbers = #tpu.dot_dimension_numbers<[1], [0], [0], [1], [0, 0, 1, 1], [], []>} : vector<20x100xf32>, vector<100x10xf32>, vector<20x10xf32> -> vector<20x10xf32>
    %c0_3 = arith.constant 0 : index
    %c0_4 = arith.constant 0 : index
    %3 = vector.load %arg2[%c0_3, %c0_4] : memref<1x10xf32, #tpu.memory_space<vmem>>, vector<1x10xf32>
    %4 = vector.broadcast %3 : vector<1x10xf32> to vector<20x10xf32>
    %5 = arith.addf %2, %4 : vector<20x10xf32>
    %cst_5 = arith.constant 1.000000e+01 : f32
    %6 = vector.broadcast %cst_5 : f32 to vector<20x10xf32>
    %7 = arith.subf %5, %6 : vector<20x10xf32>
    %c0_6 = arith.constant 0 : index
    %c0_7 = arith.constant 0 : index
    %8 = vector.load %arg3[%c0_6, %c0_7] : memref<20x10xf32, #tpu.memory_space<vmem>>, vector<20x10xf32>
    tpu.vector_store %arg3[%c0_6, %c0_7], %7 {strides = array<i32>} : memref<20x10xf32, #tpu.memory_space<vmem>>, vector<20x10xf32>,
    return
  }
}

</mosaic_0001>

<llo_original>
// kernel: linear_sub10.1
$region0: #{linear_sub10.1}
  #allocation0 [shape = 'u32[]', space=smem, size = 0x4, offset = 0x4, fixed_abs, tag = 'smem constant byte address 0x4 - core index']
  #allocation1 [shape = 'u32[144,128]{1,0:T(1,128)}', space=vmem, size = 0x12000, scoped, tag = 'internal scratch']
  %s0 = inlined_call_operand.vmem [shape: f32[20,100], index: 0, kind: input, shape index: {}]
  %s1 = inlined_call_operand.vmem [shape: f32[100,10], index: 1, kind: input, shape index: {}]
  %s2 = inlined_call_operand.vmem [shape: f32[1,10], index: 2, kind: input, shape index: {}]
  %s3 = inlined_call_operand.vmem [shape: f32[20,10], index: 3, kind: output, shape index: {}]
  %s4 = sld [smem:[#allocation0]]
  $region22: #{linear_sub10.1} parent=0
    _
  %s6 = ssub.s32 1, %s4
  %s7 = scalar_select 0, %s6, %s4
  // Predicated region
  $region2: #{linear_sub10.1} parent=0 // pred_check
    _
  $region3: #{linear_sub10.1} parent=0 // pred_check_branch
    %9 = sbr.rel (0) target = $region5
  $region4: #{linear_sub10.1} parent=0 // pred_region
    _
  $region5: #{linear_sub10.1} parent=0 // pred_fallthru
    _
  // Predicated region
  $region6: #{linear_sub10.1} parent=0 // pred_check
    _
  $region7: #{linear_sub10.1} parent=0 // pred_check_branch
    %11 = sbr.rel (0) target = $region9
  $region8: #{linear_sub10.1} parent=0 // pred_region
    _
  $region9: #{linear_sub10.1} parent=0 // pred_fallthru
    _
  // Predicated region
  $region10: #{linear_sub10.1} parent=0 // pred_check
    _
  $region11: #{linear_sub10.1} parent=0 // pred_check_branch
    %13 = sbr.rel (0) target = $region13
  $region12: #{linear_sub10.1} parent=0 // pred_region
    _
  $region13: #{linear_sub10.1} parent=0 // pred_fallthru
    _
  %v14 = vld [vmem:[%s0] sm:$0xff]
  %v15 = vld [vmem:[%s0 + $0x8] sm:$0xff]
  %v16 = vld [vmem:[%s0 + $0x10] sm:$0xf]
  %v17 = vld [vmem:[%s1] sm:$0xff]
  %v18 = vld [vmem:[%s1 + $0x8] sm:$0xff]
  %v19 = vld [vmem:[%s1 + $0x10] sm:$0xff]
  %v20 = vld [vmem:[%s1 + $0x18] sm:$0xff]
  %v21 = vld [vmem:[%s1 + $0x20] sm:$0xff]
  %v22 = vld [vmem:[%s1 + $0x28] sm:$0xff]
  %v23 = vld [vmem:[%s1 + $0x30] sm:$0xff]
  %v24 = vld [vmem:[%s1 + $0x38] sm:$0xff]
  %v25 = vld [vmem:[%s1 + $0x40] sm:$0xff]
  %v26 = vld [vmem:[%s1 + $0x48] sm:$0xff]
  %v27 = vld [vmem:[%s1 + $0x50] sm:$0xff]
  %v28 = vld [vmem:[%s1 + $0x58] sm:$0xff]
  %v29 = vld [vmem:[%s1 + $0x60] sm:$0xf]
  %v30 = vld [vmem:[%s2] sm:$0x1]
  %v32 = vlaneseq
  %v33 = vshrl.u32 %v32, 7
  %v34 = vsub.s32 0, %v33
  %v35 = vrot.slane %v30, %v34
  %vm37 = vcmask 818176
  %v39 = vsel %vm37, %v14, 0
  %v42 = vsel %vm37, %v15, 0
  %v45 = vsel %vm37, %v16, 0
  %vm47 = vcmask 1043456
  %v49 = vsel %vm47, %v29, 0
  %51 = vmatprep.subr.mxu0 0.0
  %52 = vmatpush1.msra.mxu0 %v17
  %53 = vmatprep.subr.mxu0 0.0
  %54 = vmatpush1.msra.mxu0 %v18
  %55 = vmatprep.subr.mxu0 0.0
  %56 = vmatpush1.msra.mxu0 %v19
  %57 = vmatprep.subr.mxu0 0.0
  %58 = vmatpush1.msra.mxu0 %v20
  %59 = vmatprep.subr.mxu0 0.0
  %60 = vmatpush1.msra.mxu0 %v21
  %61 = vmatprep.subr.mxu0 0.0
  %62 = vmatpush1.msra.mxu0 %v22
  %63 = vmatprep.subr.mxu0 0.0
  %64 = vmatpush1.msra.mxu0 %v23
  %65 = vmatprep.subr.mxu0 0.0
  %66 = vmatpush1.msra.mxu0 %v24
  %67 = vmatprep.subr.mxu0 0.0
  %68 = vmatpush1.msra.mxu0 %v25
  %69 = vmatprep.subr.mxu0 0.0
  %70 = vmatpush1.msra.mxu0 %v26
  %71 = vmatprep.subr.mxu0 0.0
  %72 = vmatpush1.msra.mxu0 %v27
  %73 = vmatprep.subr.mxu0 0.0
  %74 = vmatpush1.msra.mxu0 %v28
  %75 = vmatprep.subr.mxu0 0.0
  %76 = vmatpush1.msra.mxu0 %v49
  %77 = vmatprep.subr.mxu0 0.0
  %78 = vmatpush1.msra.mxu0 0.0
  %79 = vmatprep.subr.mxu0 0.0
  %80 = vmatpush1.msra.mxu0 0.0
  %81 = vmatprep.subr.mxu0 0.0
  %82 = vmatpush1.msra.mxu0 0.0
  %83 = vmatprep.subr.mxu0 0.0
  %84 = vmatpush1.msra.mxu0 0.0
  %85 = vmatprep.subr.mxu0 0.0
  %86 = vmatpush1.msra.mxu0 0.0
  %87 = vmatprep.subr.mxu0 0.0
  %88 = vmatpush1.msra.mxu0 0.0
  %89 = vmatprep.subr.mxu0 0.0
  %90 = vmatpush1.msra.mxu0 0.0
  %91 = vmatprep.subr.mxu0 0.0
  %92 = vmatpush1.msra.mxu0 0.0
  %93 = vmatprep.subr.mxu0 0.0
  %94 = vmatpush1.msra.mxu0 0.0
  %95 = vmatprep.subr.mxu0 0.0
  %96 = vmatpush1.msra.mxu0 0.0
  %97 = vmatprep.subr.mxu0 0.0
  %98 = vmatpush1.msra.mxu0 0.0
  %99 = vmatprep.subr.mxu0 0.0
  %100 = vmatpush1.msra.mxu0 0.0
  %101 = vmatprep.subr.mxu0 0.0
  %102 = vmatpush1.msra.mxu0 0.0
  %103 = vmatprep.subr.mxu0 0.0
  %104 = vmatpush1.msra.mxu0 0.0
  %105 = vmatprep.subr.mxu0 0.0
  %106 = vmatpush1.msra.mxu0 0.0
  %107 = vmatprep.subr.mxu0 0.0
  %108 = vmatpush1.msra.mxu0 0.0
  %109 = vmatprep.subr.mxu0 0.0
  %110 = vmatpush1.msra.mxu0 0.0
  %111 = vmatprep.subr.mxu0 0.0
  %112 = vmatpush1.msra.mxu0 0.0
  %113 = vmatprep.subr.mxu0 0.0
  %114 = vmatpush1.msra.mxu0 0.0
  %115 = vmatprep.mubr.f32.mxu0 0.0
  %116 = vmatmul.mubr.f32.gmra.mrb[0].mxu0 %v39
  %v117 = vpop.f32.mrb[0].mxu0
  %v118 = vadd.f32 %v35, %v117
  %v119 = vpop.f32.mrb[0].mxu0
  %120 = vmatprep.mubr.f32.mxu0 0.0
  %121 = vmatmul.mubr.f32.gmra.mrb[0].mxu0 %v42
  %v122 = vpop.f32.mrb[0].mxu0
  %v123 = vadd.f32 %v35, %v122
  %v124 = vpop.f32.mrb[0].mxu0
  %125 = vmatprep.mubr.f32.mxu0 0.0
  %126 = vmatmul.mubr.f32.gmra.mrb[0].mxu0 %v45
  %v127 = vpop.f32.mrb[0].mxu0
  %v128 = vadd.f32 %v35, %v127
  %v129 = vpop.f32.mrb[0].mxu0
  %130 = vdwg.mxu0
  %v131 = vsub.f32 %v118, 10.0
  %v132 = vsub.f32 %v123, 10.0
  %v133 = vsub.f32 %v128, 10.0
  %vm134 = vcmask 80896
  %135 = vst.msk [vmem:[%s3] sm:$0xff] %vm134, %v131
  %136 = vst.msk [vmem:[%s3 + $0x8] sm:$0xff] %vm134, %v132
  %vm137 = vcmask 76800
  %138 = vst.msk [vmem:[%s3 + $0x10] sm:$0xf] %vm137, %v133
  // Predicated region
  $region14: #{linear_sub10.1} parent=0 // pred_check
    _
  $region15: #{linear_sub10.1} parent=0 // pred_check_branch
    %140 = sbr.rel (0) target = $region17
  $region16: #{linear_sub10.1} parent=0 // pred_region
    _
  $region17: #{linear_sub10.1} parent=0 // pred_fallthru
    _
  // Predicated region
  $region18: #{linear_sub10.1} parent=0 // pred_check
    _
  $region19: #{linear_sub10.1} parent=0 // pred_check_branch
    %142 = sbr.rel (0) target = $region21
  $region20: #{linear_sub10.1} parent=0 // pred_region
    _
  $region21: #{linear_sub10.1} parent=0 // pred_fallthru
    _

</llo_original>
